<compile_context>
chip_gen: v6e
topology: v6e:2x2x1
jax: 0.10.0
libtpu: 0.0.40
codegen_flags: <defaults>
</compile_context>

<pallas_src>
import functools
import math

import jax
import jax.numpy as jnp
from jax import lax
from jax.experimental import pallas as pl
from jax.experimental.pallas import tpu as pltpu

_COLS = 128                                   # lane width
_NEG_KEY = int(jnp.iinfo(jnp.int32).min)      # knockout / padding sentinel


def _cdiv(a, b):
    return -(-a // b)


def _rup(a, b):
    return _cdiv(a, b) * b


def _hint8(v):
    # Alignment hint only makes sense for traced offsets.
    return v if isinstance(v, int) else pl.multiple_of(v, 8)


def _topk_kernel(keys_hbm, idx_ref, keys_ref, gmax_ref, copy_sem, *,
                 num_hubs, n_chunks, chunk_rows, G, cgpc, nb):
    """Top-`num_hubs` flat indices of the (rows_p, 128) int32 key array.

    keys_hbm: (rows_p, 128) i32 HBM   -- monotone sort keys (wrapper-made)
    idx_ref:  (num_hubs,)   i32 SMEM  -- output indices, descending value
    keys_ref: (rows_p, 128) i32 VMEM  -- single resident buffer (in-place knockouts)
    gmax_ref: (nb, 128)     i32 VMEM  -- lane-dense per-group maxima
    copy_sem: (n_chunks,)   DMA sems
    """
    NEG = jnp.int32(_NEG_KEY)

    def chunk_dma(c):
        start = c * chunk_rows
        return pltpu.make_async_copy(
            keys_hbm.at[pl.ds(start, chunk_rows)],
            keys_ref.at[pl.ds(start, chunk_rows)],
            copy_sem.at[c],
        )

    def chunk_body(c):
        # Wait for this chunk, then fold its per-group lane-dense maxima.
        chunk_dma(c).wait()
        base_r = c * chunk_rows
        base_g = c * cgpc
        for g in range(cgpc):  # static, small (<= 64)
            grp = keys_ref[pl.ds(_hint8(base_r + g * G), G), :]       # (G, 128)
            gmax_ref[pl.ds(base_g + g, 1), :] = jnp.max(
                grp, axis=0, keepdims=True)                            # (1, 128)

    # ---- Pass 1: stream HBM -> VMEM, overlapping DMA with the group-max pass.
    chunk_dma(0).start()
    if n_chunks <= 8:
        # Small chunk count (covers the test shapes): fully static indexing.
        for c in range(n_chunks):
            if c + 1 < n_chunks:
                chunk_dma(c + 1).start()
            chunk_body(c)
    else:
        @pl.loop(0, n_chunks)
        def _(c):
            nxt = jnp.minimum(c + 1, n_chunks - 1)   # clamped; guarded below

            @pl.when(c + 1 < n_chunks)
            def _():
                chunk_dma(nxt).start()

            chunk_body(c)

    # ---- Pass 2: two-level tournament over the lane-dense group maxima.
    grp_ids = lax.broadcasted_iota(jnp.int32, (nb, 1), 0)
    blk_rows = lax.broadcasted_iota(jnp.int32, (G, 1), 0)
    col_ids = lax.broadcasted_iota(jnp.int32, (1, _COLS), 1)

    def hub_step(i, gmax):
        m = jnp.max(gmax)                                              # scalar
        # Earliest group containing the max (global min-flat-index tie-break).
        b = jnp.min(jnp.where(gmax == m, grp_ids, jnp.int32(nb)))
        base = _hint8(b * G)
        blk = keys_ref[pl.ds(base, G), :]                              # (G, 128)
        eq = blk == m
        rr = jnp.min(jnp.where(eq, blk_rows, jnp.int32(G)))
        cc = jnp.min(jnp.where(eq & (blk_rows == rr), col_ids, jnp.int32(_COLS)))
        idx_ref[i] = ((b * G + rr) * _COLS + cc).astype(jnp.int32)
        # Knock out only the winner, in place, and refresh gmax[b, cc].
        knocked = jnp.where((blk_rows == rr) & (col_ids == cc), NEG, blk)
        keys_ref[pl.ds(base, G), :] = knocked
        col_max = jnp.max(jnp.where(col_ids == cc, knocked, NEG))      # scalar
        return jnp.where((grp_ids == b) & (col_ids == cc), col_max, gmax)

    gmax0 = gmax_ref[...]
    if num_hubs <= 16:
        g = gmax0
        for i in range(num_hubs):
            g = hub_step(i, g)
    else:
        lax.fori_loop(0, num_hubs, hub_step, gmax0, unroll=4)


@functools.partial(jax.jit, static_argnames=("num_hubs",))
def hub_selector_forward(scores: jax.Array, num_hubs: int) -> jax.Array:
    """Pallas equivalent of HubSelector.forward(): top-k indices of `scores`."""
    seq_len = scores.shape[0]
    assert 0 < num_hubs <= seq_len

    rows = _cdiv(seq_len, _COLS)
    # Group size ~ sqrt(rows), multiple of 8 sublanes (one vreg tile), capped.
    G = max(8, min(512, _rup(math.isqrt(max(rows, 1)), 8)))
    rows_g = _rup(rows, G)
    # Chunk ~ 512 rows (256 KB of i32), a multiple of G, at most 32 chunks.
    chunk_rows = min(max(1, 512 // G) * G, rows_g)
    if _cdiv(rows_g, chunk_rows) > 32:
        chunk_rows = _rup(_cdiv(rows_g, 32), G)
    cgpc = chunk_rows // G                       # groups per chunk
    n_chunks = _cdiv(rows, chunk_rows)
    rows_p = n_chunks * chunk_rows               # padded row count
    nb = rows_p // G                             # number of groups

    # Monotone f32 -> i32 sort keys in the wrapper (fuses with pad/reshape):
    # flip non-sign bits of negatives so signed-int32 order == float order.
    # The knockout/padding sentinel INT32_MIN is below every real key.
    x = scores.astype(jnp.float32)
    bits = lax.bitcast_convert_type(x, jnp.int32)
    keys = jnp.where(bits < 0, bits ^ jnp.int32(0x7FFFFFFF), bits)
    keys = jnp.pad(keys, (0, rows_p * _COLS - seq_len),
                   constant_values=_NEG_KEY)
    keys = keys.reshape(rows_p, _COLS)           # lane/sublane-dense layout

    kernel = functools.partial(
        _topk_kernel, num_hubs=num_hubs, n_chunks=n_chunks,
        chunk_rows=chunk_rows, G=G, cgpc=cgpc, nb=nb)

    # VMEM: one resident i32 key buffer + tiny group-max buffer + slack,
    # clamped to the actual generation capacity (64 MiB on v7x).
    footprint = (rows_p + nb) * _COLS * 4
    try:
        cap = int(pltpu.get_tpu_info().vmem_capacity_bytes)
    except Exception:
        cap = 64 << 20  # v7x floor
    vmem_limit = int(min(max(footprint + (4 << 20), 16 << 20), (cap * 4) // 5))

    return pl.pallas_call(
        kernel,
        out_shape=jax.ShapeDtypeStruct((num_hubs,), jnp.int32),
        in_specs=[pl.BlockSpec(memory_space=pl.ANY)],   # keys stay in HBM; manual DMA
        out_specs=pl.BlockSpec(memory_space=pltpu.SMEM),
        scratch_shapes=[
            pltpu.VMEM((rows_p, _COLS), jnp.int32),     # resident keys (in-place)
            pltpu.VMEM((nb, _COLS), jnp.int32),         # lane-dense group maxima
            pltpu.SemaphoreType.DMA((n_chunks,)),
        ],
        compiler_params=pltpu.CompilerParams(vmem_limit_bytes=vmem_limit),
    )(keys)


class HubSelector:
    """JAX/Pallas port of the PyTorch HubSelector module."""

    def __init__(self, seq_len: int, num_hubs: int, key: jax.Array):
        self.seq_len = seq_len
        self.num_hubs = num_hubs
        # Deterministic stand-in for nn.Parameter(torch.randn(seq_len)).
        self.scores = jax.random.normal(key, (seq_len,), dtype=jnp.float32)

    def __call__(self) -> jax.Array:
        return hub_selector_forward(self.scores, self.num_hubs)


if __name__ == "__main__":
    # Small shape matching the module spec (single group, single chunk).
    m1 = HubSelector(seq_len=8, num_hubs=3, key=jax.random.PRNGKey(0))
    out1 = jax.block_until_ready(m1())
    ref1 = lax.top_k(m1.scores, m1.num_hubs)[1].astype(jnp.int32)
    assert out1.shape == (3,) and out1.dtype == jnp.int32
    assert jnp.array_equal(out1, ref1), (out1, ref1)

    # Padded case (300 -> 3 rows) exercising -inf/sentinel padding.
    m2 = HubSelector(seq_len=300, num_hubs=5, key=jax.random.PRNGKey(1))
    out2 = jax.block_until_ready(m2())
    ref2 = lax.top_k(m2.scores, m2.num_hubs)[1].astype(jnp.int32)
    assert jnp.array_equal(out2, ref2), (out2, ref2)

    # Multi-group case (24 rows -> 3 groups of G=8) exercising the lane-dense
    # group-max tournament and in-place knockouts across groups.
    m3 = HubSelector(seq_len=3000, num_hubs=7, key=jax.random.PRNGKey(2))
    out3 = jax.block_until_ready(m3())
    ref3 = lax.top_k(m3.scores, m3.num_hubs)[1].astype(jnp.int32)
    assert jnp.array_equal(out3, ref3), (out3, ref3)

    print("KERNEL_OK")
</pallas_src>

<mosaic_0001>
module attributes {stable_mosaic.version = 11 : i64} {
  func.func @_topk_kernel(%arg0: memref<8x128xi32, #tpu.memory_space<any>>, %arg1: memref<3xi32, #tpu.memory_space<smem>>, %arg2: memref<8x128xi32, #tpu.memory_space<vmem>>, %arg3: memref<1x128xi32, #tpu.memory_space<vmem>>, %arg4: memref<1x!tpu.dma_semaphore, #tpu.memory_space<semaphore_mem>>) attributes {dimension_semantics = [], scalar_prefetch = 0 : i64, scratch_operands = 3 : i64, tpu.core_type = #tpu.core_type<tc>} {
    %c0_i32 = arith.constant 0 : i32
    %c0_i32_0 = arith.constant 0 : i32
    %c0_i32_1 = arith.constant 0 : i32
    %0 = tpu.memref_slice %arg0[%c0_i32_0, %c0_i32_1] : memref<8x128xi32, #tpu.memory_space<any>> -> memref<8x128xi32, #tpu.memory_space<any>>
    %c0_i32_2 = arith.constant 0 : i32
    %c0_i32_3 = arith.constant 0 : i32
    %1 = tpu.memref_slice %arg2[%c0_i32_2, %c0_i32_3] : memref<8x128xi32, #tpu.memory_space<vmem>> -> memref<8x128xi32, #tpu.memory_space<vmem>>
    %2 = tpu.memref_slice %arg4[%c0_i32] : memref<1x!tpu.dma_semaphore, #tpu.memory_space<semaphore_mem>> -> memref<1x!tpu.dma_semaphore, #tpu.memory_space<semaphore_mem>>
    %3 = tpu.memref_squeeze %2 : memref<1x!tpu.dma_semaphore, #tpu.memory_space<semaphore_mem>> -> memref<!tpu.dma_semaphore, #tpu.memory_space<semaphore_mem>>
    tpu.enqueue_dma source(%0 : memref<8x128xi32, #tpu.memory_space<any>>) target(%1 : memref<8x128xi32, #tpu.memory_space<vmem>>) target_semaphore(%3 : memref<!tpu.dma_semaphore, #tpu.memory_space<semaphore_mem>>)
    %c0_i32_4 = arith.constant 0 : i32
    %c0_i32_5 = arith.constant 0 : i32
    %c0_i32_6 = arith.constant 0 : i32
    %4 = tpu.memref_slice %arg0[%c0_i32_5, %c0_i32_6] : memref<8x128xi32, #tpu.memory_space<any>> -> memref<8x128xi32, #tpu.memory_space<any>>
    %c0_i32_7 = arith.constant 0 : i32
    %c0_i32_8 = arith.constant 0 : i32
    %5 = tpu.memref_slice %arg2[%c0_i32_7, %c0_i32_8] : memref<8x128xi32, #tpu.memory_space<vmem>> -> memref<8x128xi32, #tpu.memory_space<vmem>>
    %6 = tpu.memref_slice %arg4[%c0_i32_4] : memref<1x!tpu.dma_semaphore, #tpu.memory_space<semaphore_mem>> -> memref<1x!tpu.dma_semaphore, #tpu.memory_space<semaphore_mem>>
    %7 = tpu.memref_squeeze %6 : memref<1x!tpu.dma_semaphore, #tpu.memory_space<semaphore_mem>> -> memref<!tpu.dma_semaphore, #tpu.memory_space<semaphore_mem>>
    tpu.wait_dma2 semaphore(%7 : memref<!tpu.dma_semaphore, #tpu.memory_space<semaphore_mem>>) src(%4 : memref<8x128xi32, #tpu.memory_space<any>>) dst(%5 : memref<8x128xi32, #tpu.memory_space<vmem>>)
    %c0 = arith.constant 0 : index
    %c0_9 = arith.constant 0 : index
    %8 = vector.load %arg2[%c0, %c0_9] : memref<8x128xi32, #tpu.memory_space<vmem>>, vector<8x128xi32>
    %cst = arith.constant dense<-2147483648> : vector<128xi32>
    %9 = vector.multi_reduction <maxsi>, %8, %cst [0] : vector<8x128xi32> to vector<128xi32>
    %10 = vector.shape_cast %9 : vector<128xi32> to vector<1x128xi32>
    %c0_10 = arith.constant 0 : index
    %c0_11 = arith.constant 0 : index
    %11 = vector.load %arg3[%c0_10, %c0_11] : memref<1x128xi32, #tpu.memory_space<vmem>>, vector<1x128xi32>
    tpu.vector_store %arg3[%c0_10, %c0_11], %10 {strides = array<i32>} : memref<1x128xi32, #tpu.memory_space<vmem>>, vector<1x128xi32>,
    %12 = tpu.iota {dimensions = array<i32: 0>} : vector<1x1xi32>
    %13 = tpu.iota {dimensions = array<i32: 0>} : vector<8x1xi32>
    %14 = tpu.iota {dimensions = array<i32: 1>} : vector<1x128xi32>
    %c0_12 = arith.constant 0 : index
    %c0_13 = arith.constant 0 : index
    %15 = vector.load %arg3[%c0_12, %c0_13] : memref<1x128xi32, #tpu.memory_space<vmem>>, vector<1x128xi32>
    %16 = vector.shape_cast %15 : vector<1x128xi32> to vector<1x1x128xi32>
    %cst_14 = arith.constant dense<-2147483648> : vector<1xi32>
    %17 = vector.multi_reduction <maxsi>, %16, %cst_14 [1, 2] : vector<1x1x128xi32> to vector<1xi32>
    %18 = vector.shape_cast %17 : vector<1xi32> to vector<1x1x1xi32>
    %19 = vector.extract %18[0, 0, 0] : i32 from vector<1x1x1xi32>
    %20 = vector.broadcast %19 : i32 to vector<1x128xi32>
    %21 = arith.cmpi eq, %15, %20 : vector<1x128xi32>
    %c1_i32 = arith.constant 1 : i32
    %22 = vector.shape_cast %12 : vector<1x1xi32> to vector<1x1xi32>
    %23 = vector.broadcast %22 : vector<1x1xi32> to vector<1x128xi32>
    %24 = vector.broadcast %c1_i32 : i32 to vector<1x128xi32>
    %25 = arith.select %21, %23, %24 : vector<1x128xi1>, vector<1x128xi32>
    %26 = vector.shape_cast %25 : vector<1x128xi32> to vector<1x1x128xi32>
    %cst_15 = arith.constant dense<2147483647> : vector<1xi32>
    %27 = vector.multi_reduction <minsi>, %26, %cst_15 [1, 2] : vector<1x1x128xi32> to vector<1xi32>
    %28 = vector.shape_cast %27 : vector<1xi32> to vector<1x1x1xi32>
    %29 = vector.extract %28[0, 0, 0] : i32 from vector<1x1x1xi32>
    %c8_i32 = arith.constant 8 : i32
    %30 = arith.muli %29, %c8_i32 : i32
    %31 = tpu.assume_multiple %30, 8 : i32
    %32 = arith.index_cast %31 : i32 to index
    %c0_16 = arith.constant 0 : index
    %33 = vector.load %arg2[%32, %c0_16] : memref<8x128xi32, #tpu.memory_space<vmem>>, vector<8x128xi32>
    %34 = vector.broadcast %19 : i32 to vector<8x128xi32>
    %35 = arith.cmpi eq, %33, %34 : vector<8x128xi32>
    %c8_i32_17 = arith.constant 8 : i32
    %36 = vector.shape_cast %13 : vector<8x1xi32> to vector<8x1xi32>
    %37 = vector.broadcast %36 : vector<8x1xi32> to vector<8x128xi32>
    %38 = vector.broadcast %c8_i32_17 : i32 to vector<8x128xi32>
    %39 = arith.select %35, %37, %38 : vector<8x128xi1>, vector<8x128xi32>
    %40 = vector.shape_cast %39 : vector<8x128xi32> to vector<1x8x128xi32>
    %cst_18 = arith.constant dense<2147483647> : vector<1xi32>
    %41 = vector.multi_reduction <minsi>, %40, %cst_18 [1, 2] : vector<1x8x128xi32> to vector<1xi32>
    %42 = vector.shape_cast %41 : vector<1xi32> to vector<1x1x1xi32>
    %43 = vector.extract %42[0, 0, 0] : i32 from vector<1x1x1xi32>
    %44 = vector.broadcast %43 : i32 to vector<8x1xi32>
    %45 = arith.cmpi eq, %13, %44 : vector<8x1xi32>
    %46 = vector.broadcast %45 : vector<8x1xi1> to vector<8x128xi1>
    %47 = arith.andi %35, %46 : vector<8x128xi1>
    %c128_i32 = arith.constant 128 : i32
    %48 = vector.shape_cast %14 : vector<1x128xi32> to vector<1x128xi32>
    %49 = vector.broadcast %48 : vector<1x128xi32> to vector<8x128xi32>
    %50 = vector.broadcast %c128_i32 : i32 to vector<8x128xi32>
    %51 = arith.select %47, %49, %50 : vector<8x128xi1>, vector<8x128xi32>
    %52 = vector.shape_cast %51 : vector<8x128xi32> to vector<1x8x128xi32>
    %cst_19 = arith.constant dense<2147483647> : vector<1xi32>
    %53 = vector.multi_reduction <minsi>, %52, %cst_19 [1, 2] : vector<1x8x128xi32> to vector<1xi32>
    %54 = vector.shape_cast %53 : vector<1xi32> to vector<1x1x1xi32>
    %55 = vector.extract %54[0, 0, 0] : i32 from vector<1x1x1xi32>
    %c8_i32_20 = arith.constant 8 : i32
    %56 = arith.muli %29, %c8_i32_20 : i32
    %57 = arith.addi %56, %43 : i32
    %c128_i32_21 = arith.constant 128 : i32
    %58 = arith.muli %57, %c128_i32_21 : i32
    %59 = arith.addi %58, %55 : i32
    %c0_22 = arith.constant 0 : index
    %60 = memref.load %arg1[%c0_22] : memref<3xi32, #tpu.memory_space<smem>>
    memref.store %59, %arg1[%c0_22] : memref<3xi32, #tpu.memory_space<smem>>
    %61 = vector.broadcast %43 : i32 to vector<8x1xi32>
    %62 = arith.cmpi eq, %13, %61 : vector<8x1xi32>
    %63 = vector.broadcast %55 : i32 to vector<1x128xi32>
    %64 = arith.cmpi eq, %14, %63 : vector<1x128xi32>
    %65 = vector.broadcast %62 : vector<8x1xi1> to vector<8x128xi1>
    %66 = vector.broadcast %64 : vector<1x128xi1> to vector<8x128xi1>
    %67 = arith.andi %65, %66 : vector<8x128xi1>
    %c-2147483648_i32 = arith.constant -2147483648 : i32
    %68 = vector.broadcast %c-2147483648_i32 : i32 to vector<8x128xi32>
    %69 = arith.select %67, %68, %33 : vector<8x128xi1>, vector<8x128xi32>
    %70 = arith.index_cast %31 : i32 to index
    %c0_23 = arith.constant 0 : index
    %71 = vector.load %arg2[%70, %c0_23] : memref<8x128xi32, #tpu.memory_space<vmem>>, vector<8x128xi32>
    tpu.vector_store %arg2[%70, %c0_23], %69 {strides = array<i32>} : memref<8x128xi32, #tpu.memory_space<vmem>>, vector<8x128xi32>,
    %72 = vector.broadcast %55 : i32 to vector<1x128xi32>
    %73 = arith.cmpi eq, %14, %72 : vector<1x128xi32>
    %c-2147483648_i32_24 = arith.constant -2147483648 : i32
    %74 = vector.shape_cast %73 : vector<1x128xi1> to vector<1x128xi1>
    %75 = vector.broadcast %74 : vector<1x128xi1> to vector<8x128xi1>
    %76 = vector.broadcast %c-2147483648_i32_24 : i32 to vector<8x128xi32>
    %77 = arith.select %75, %69, %76 : vector<8x128xi1>, vector<8x128xi32>
    %78 = vector.shape_cast %77 : vector<8x128xi32> to vector<1x8x128xi32>
    %cst_25 = arith.constant dense<-2147483648> : vector<1xi32>
    %79 = vector.multi_reduction <maxsi>, %78, %cst_25 [1, 2] : vector<1x8x128xi32> to vector<1xi32>
    %80 = vector.shape_cast %79 : vector<1xi32> to vector<1x1x1xi32>
    %81 = vector.extract %80[0, 0, 0] : i32 from vector<1x1x1xi32>
    %82 = vector.broadcast %29 : i32 to vector<1x1xi32>
    %83 = arith.cmpi eq, %12, %82 : vector<1x1xi32>
    %84 = vector.broadcast %55 : i32 to vector<1x128xi32>
    %85 = arith.cmpi eq, %14, %84 : vector<1x128xi32>
    %86 = vector.broadcast %83 : vector<1x1xi1> to vector<1x128xi1>
    %87 = arith.andi %86, %85 : vector<1x128xi1>
    %88 = vector.broadcast %81 : i32 to vector<1x128xi32>
    %89 = arith.select %87, %88, %15 : vector<1x128xi1>, vector<1x128xi32>
    %90 = vector.shape_cast %89 : vector<1x128xi32> to vector<1x1x128xi32>
    %cst_26 = arith.constant dense<-2147483648> : vector<1xi32>
    %91 = vector.multi_reduction <maxsi>, %90, %cst_26 [1, 2] : vector<1x1x128xi32> to vector<1xi32>
    %92 = vector.shape_cast %91 : vector<1xi32> to vector<1x1x1xi32>
    %93 = vector.extract %92[0, 0, 0] : i32 from vector<1x1x1xi32>
    %94 = vector.broadcast %93 : i32 to vector<1x128xi32>
    %95 = arith.cmpi eq, %89, %94 : vector<1x128xi32>
    %c1_i32_27 = arith.constant 1 : i32
    %96 = vector.shape_cast %12 : vector<1x1xi32> to vector<1x1xi32>
    %97 = vector.broadcast %96 : vector<1x1xi32> to vector<1x128xi32>
    %98 = vector.broadcast %c1_i32_27 : i32 to vector<1x128xi32>
    %99 = arith.select %95, %97, %98 : vector<1x128xi1>, vector<1x128xi32>
    %100 = vector.shape_cast %99 : vector<1x128xi32> to vector<1x1x128xi32>
    %cst_28 = arith.constant dense<2147483647> : vector<1xi32>
    %101 = vector.multi_reduction <minsi>, %100, %cst_28 [1, 2] : vector<1x1x128xi32> to vector<1xi32>
    %102 = vector.shape_cast %101 : vector<1xi32> to vector<1x1x1xi32>
    %103 = vector.extract %102[0, 0, 0] : i32 from vector<1x1x1xi32>
    %c8_i32_29 = arith.constant 8 : i32
    %104 = arith.muli %103, %c8_i32_29 : i32
    %105 = tpu.assume_multiple %104, 8 : i32
    %106 = arith.index_cast %105 : i32 to index
    %c0_30 = arith.constant 0 : index
    %107 = vector.load %arg2[%106, %c0_30] : memref<8x128xi32, #tpu.memory_space<vmem>>, vector<8x128xi32>
    %108 = vector.broadcast %93 : i32 to vector<8x128xi32>
    %109 = arith.cmpi eq, %107, %108 : vector<8x128xi32>
    %c8_i32_31 = arith.constant 8 : i32
    %110 = vector.shape_cast %13 : vector<8x1xi32> to vector<8x1xi32>
    %111 = vector.broadcast %110 : vector<8x1xi32> to vector<8x128xi32>
    %112 = vector.broadcast %c8_i32_31 : i32 to vector<8x128xi32>
    %113 = arith.select %109, %111, %112 : vector<8x128xi1>, vector<8x128xi32>
    %114 = vector.shape_cast %113 : vector<8x128xi32> to vector<1x8x128xi32>
    %cst_32 = arith.constant dense<2147483647> : vector<1xi32>
    %115 = vector.multi_reduction <minsi>, %114, %cst_32 [1, 2] : vector<1x8x128xi32> to vector<1xi32>
    %116 = vector.shape_cast %115 : vector<1xi32> to vector<1x1x1xi32>
    %117 = vector.extract %116[0, 0, 0] : i32 from vector<1x1x1xi32>
    %118 = vector.broadcast %117 : i32 to vector<8x1xi32>
    %119 = arith.cmpi eq, %13, %118 : vector<8x1xi32>
    %120 = vector.broadcast %119 : vector<8x1xi1> to vector<8x128xi1>
    %121 = arith.andi %109, %120 : vector<8x128xi1>
    %c128_i32_33 = arith.constant 128 : i32
    %122 = vector.shape_cast %14 : vector<1x128xi32> to vector<1x128xi32>
    %123 = vector.broadcast %122 : vector<1x128xi32> to vector<8x128xi32>
    %124 = vector.broadcast %c128_i32_33 : i32 to vector<8x128xi32>
    %125 = arith.select %121, %123, %124 : vector<8x128xi1>, vector<8x128xi32>
    %126 = vector.shape_cast %125 : vector<8x128xi32> to vector<1x8x128xi32>
    %cst_34 = arith.constant dense<2147483647> : vector<1xi32>
    %127 = vector.multi_reduction <minsi>, %126, %cst_34 [1, 2] : vector<1x8x128xi32> to vector<1xi32>
    %128 = vector.shape_cast %127 : vector<1xi32> to vector<1x1x1xi32>
    %129 = vector.extract %128[0, 0, 0] : i32 from vector<1x1x1xi32>
    %c8_i32_35 = arith.constant 8 : i32
    %130 = arith.muli %103, %c8_i32_35 : i32
    %131 = arith.addi %130, %117 : i32
    %c128_i32_36 = arith.constant 128 : i32
    %132 = arith.muli %131, %c128_i32_36 : i32
    %133 = arith.addi %132, %129 : i32
    %c1 = arith.constant 1 : index
    %134 = memref.load %arg1[%c1] : memref<3xi32, #tpu.memory_space<smem>>
    memref.store %133, %arg1[%c1] : memref<3xi32, #tpu.memory_space<smem>>
    %135 = vector.broadcast %117 : i32 to vector<8x1xi32>
    %136 = arith.cmpi eq, %13, %135 : vector<8x1xi32>
    %137 = vector.broadcast %129 : i32 to vector<1x128xi32>
    %138 = arith.cmpi eq, %14, %137 : vector<1x128xi32>
    %139 = vector.broadcast %136 : vector<8x1xi1> to vector<8x128xi1>
    %140 = vector.broadcast %138 : vector<1x128xi1> to vector<8x128xi1>
    %141 = arith.andi %139, %140 : vector<8x128xi1>
    %c-2147483648_i32_37 = arith.constant -2147483648 : i32
    %142 = vector.broadcast %c-2147483648_i32_37 : i32 to vector<8x128xi32>
    %143 = arith.select %141, %142, %107 : vector<8x128xi1>, vector<8x128xi32>
    %144 = arith.index_cast %105 : i32 to index
    %c0_38 = arith.constant 0 : index
    %145 = vector.load %arg2[%144, %c0_38] : memref<8x128xi32, #tpu.memory_space<vmem>>, vector<8x128xi32>
    tpu.vector_store %arg2[%144, %c0_38], %143 {strides = array<i32>} : memref<8x128xi32, #tpu.memory_space<vmem>>, vector<8x128xi32>,
    %146 = vector.broadcast %129 : i32 to vector<1x128xi32>
    %147 = arith.cmpi eq, %14, %146 : vector<1x128xi32>
    %c-2147483648_i32_39 = arith.constant -2147483648 : i32
    %148 = vector.shape_cast %147 : vector<1x128xi1> to vector<1x128xi1>
    %149 = vector.broadcast %148 : vector<1x128xi1> to vector<8x128xi1>
    %150 = vector.broadcast %c-2147483648_i32_39 : i32 to vector<8x128xi32>
    %151 = arith.select %149, %143, %150 : vector<8x128xi1>, vector<8x128xi32>
    %152 = vector.shape_cast %151 : vector<8x128xi32> to vector<1x8x128xi32>
    %cst_40 = arith.constant dense<-2147483648> : vector<1xi32>
    %153 = vector.multi_reduction <maxsi>, %152, %cst_40 [1, 2] : vector<1x8x128xi32> to vector<1xi32>
    %154 = vector.shape_cast %153 : vector<1xi32> to vector<1x1x1xi32>
    %155 = vector.extract %154[0, 0, 0] : i32 from vector<1x1x1xi32>
    %156 = vector.broadcast %103 : i32 to vector<1x1xi32>
    %157 = arith.cmpi eq, %12, %156 : vector<1x1xi32>
    %158 = vector.broadcast %129 : i32 to vector<1x128xi32>
    %159 = arith.cmpi eq, %14, %158 : vector<1x128xi32>
    %160 = vector.broadcast %157 : vector<1x1xi1> to vector<1x128xi1>
    %161 = arith.andi %160, %159 : vector<1x128xi1>
    %162 = vector.broadcast %155 : i32 to vector<1x128xi32>
    %163 = arith.select %161, %162, %89 : vector<1x128xi1>, vector<1x128xi32>
    %164 = vector.shape_cast %163 : vector<1x128xi32> to vector<1x1x128xi32>
    %cst_41 = arith.constant dense<-2147483648> : vector<1xi32>
    %165 = vector.multi_reduction <maxsi>, %164, %cst_41 [1, 2] : vector<1x1x128xi32> to vector<1xi32>
    %166 = vector.shape_cast %165 : vector<1xi32> to vector<1x1x1xi32>
    %167 = vector.extract %166[0, 0, 0] : i32 from vector<1x1x1xi32>
    %168 = vector.broadcast %167 : i32 to vector<1x128xi32>
    %169 = arith.cmpi eq, %163, %168 : vector<1x128xi32>
    %c1_i32_42 = arith.constant 1 : i32
    %170 = vector.shape_cast %12 : vector<1x1xi32> to vector<1x1xi32>
    %171 = vector.broadcast %170 : vector<1x1xi32> to vector<1x128xi32>
    %172 = vector.broadcast %c1_i32_42 : i32 to vector<1x128xi32>
    %173 = arith.select %169, %171, %172 : vector<1x128xi1>, vector<1x128xi32>
    %174 = vector.shape_cast %173 : vector<1x128xi32> to vector<1x1x128xi32>
    %cst_43 = arith.constant dense<2147483647> : vector<1xi32>
    %175 = vector.multi_reduction <minsi>, %174, %cst_43 [1, 2] : vector<1x1x128xi32> to vector<1xi32>
    %176 = vector.shape_cast %175 : vector<1xi32> to vector<1x1x1xi32>
    %177 = vector.extract %176[0, 0, 0] : i32 from vector<1x1x1xi32>
    %c8_i32_44 = arith.constant 8 : i32
    %178 = arith.muli %177, %c8_i32_44 : i32
    %179 = tpu.assume_multiple %178, 8 : i32
    %180 = arith.index_cast %179 : i32 to index
    %c0_45 = arith.constant 0 : index
    %181 = vector.load %arg2[%180, %c0_45] : memref<8x128xi32, #tpu.memory_space<vmem>>, vector<8x128xi32>
    %182 = vector.broadcast %167 : i32 to vector<8x128xi32>
    %183 = arith.cmpi eq, %181, %182 : vector<8x128xi32>
    %c8_i32_46 = arith.constant 8 : i32
    %184 = vector.shape_cast %13 : vector<8x1xi32> to vector<8x1xi32>
    %185 = vector.broadcast %184 : vector<8x1xi32> to vector<8x128xi32>
    %186 = vector.broadcast %c8_i32_46 : i32 to vector<8x128xi32>
    %187 = arith.select %183, %185, %186 : vector<8x128xi1>, vector<8x128xi32>
    %188 = vector.shape_cast %187 : vector<8x128xi32> to vector<1x8x128xi32>
    %cst_47 = arith.constant dense<2147483647> : vector<1xi32>
    %189 = vector.multi_reduction <minsi>, %188, %cst_47 [1, 2] : vector<1x8x128xi32> to vector<1xi32>
    %190 = vector.shape_cast %189 : vector<1xi32> to vector<1x1x1xi32>
    %191 = vector.extract %190[0, 0, 0] : i32 from vector<1x1x1xi32>
    %192 = vector.broadcast %191 : i32 to vector<8x1xi32>
    %193 = arith.cmpi eq, %13, %192 : vector<8x1xi32>
    %194 = vector.broadcast %193 : vector<8x1xi1> to vector<8x128xi1>
    %195 = arith.andi %183, %194 : vector<8x128xi1>
    %c128_i32_48 = arith.constant 128 : i32
    %196 = vector.shape_cast %14 : vector<1x128xi32> to vector<1x128xi32>
    %197 = vector.broadcast %196 : vector<1x128xi32> to vector<8x128xi32>
    %198 = vector.broadcast %c128_i32_48 : i32 to vector<8x128xi32>
    %199 = arith.select %195, %197, %198 : vector<8x128xi1>, vector<8x128xi32>
    %200 = vector.shape_cast %199 : vector<8x128xi32> to vector<1x8x128xi32>
    %cst_49 = arith.constant dense<2147483647> : vector<1xi32>
    %201 = vector.multi_reduction <minsi>, %200, %cst_49 [1, 2] : vector<1x8x128xi32> to vector<1xi32>
    %202 = vector.shape_cast %201 : vector<1xi32> to vector<1x1x1xi32>
    %203 = vector.extract %202[0, 0, 0] : i32 from vector<1x1x1xi32>
    %c8_i32_50 = arith.constant 8 : i32
    %204 = arith.muli %177, %c8_i32_50 : i32
    %205 = arith.addi %204, %191 : i32
    %c128_i32_51 = arith.constant 128 : i32
    %206 = arith.muli %205, %c128_i32_51 : i32
    %207 = arith.addi %206, %203 : i32
    %c2 = arith.constant 2 : index
    %208 = memref.load %arg1[%c2] : memref<3xi32, #tpu.memory_space<smem>>
    memref.store %207, %arg1[%c2] : memref<3xi32, #tpu.memory_space<smem>>
    %209 = vector.broadcast %191 : i32 to vector<8x1xi32>
    %210 = arith.cmpi eq, %13, %209 : vector<8x1xi32>
    %211 = vector.broadcast %203 : i32 to vector<1x128xi32>
    %212 = arith.cmpi eq, %14, %211 : vector<1x128xi32>
    %213 = vector.broadcast %210 : vector<8x1xi1> to vector<8x128xi1>
    %214 = vector.broadcast %212 : vector<1x128xi1> to vector<8x128xi1>
    %215 = arith.andi %213, %214 : vector<8x128xi1>
    %c-2147483648_i32_52 = arith.constant -2147483648 : i32
    %216 = vector.broadcast %c-2147483648_i32_52 : i32 to vector<8x128xi32>
    %217 = arith.select %215, %216, %181 : vector<8x128xi1>, vector<8x128xi32>
    %218 = arith.index_cast %179 : i32 to index
    %c0_53 = arith.constant 0 : index
    %219 = vector.load %arg2[%218, %c0_53] : memref<8x128xi32, #tpu.memory_space<vmem>>, vector<8x128xi32>
    tpu.vector_store %arg2[%218, %c0_53], %217 {strides = array<i32>} : memref<8x128xi32, #tpu.memory_space<vmem>>, vector<8x128xi32>,
    return
  }
}

</mosaic_0001>

<llo_original>
// kernel: hub_selector_forward.1
$region0: #{hub_selector_forward.1}
  #allocation0 [shape = 'u32[]', space=smem, size = 0x4, offset = 0x4, fixed_abs, tag = 'smem constant byte address 0x4 - core index']
  #allocation1 [shape = 'u32[144,128]{1,0:T(1,128)}', space=vmem, size = 0x12000, scoped, tag = 'internal scratch']
  #allocation2 [shape = 's32[8,128]{1,0:T(8,128)}', space=vmem, size = 0x1000, scoped, tag = 'scratch operand']
  #allocation3 [shape = 's32[1,128]{1,0:T(1,128)}', space=vmem, size = 0x200, scoped, tag = 'scratch operand']
  #allocation4 [shape = 's32[1]{0}', space=sflag, size = 0x4, scoped, tag = 'scratch operand']
  #allocation7 [shape = 's32[]', space=sflag, size = 0x4, offset = 0, fixed_abs, tag = 'sflag constant byte address 0x0 - dummy sync flag']
  %s0 = inlined_call_operand.vmem [shape: s32[8,128], index: 0, kind: input, shape index: {}]
  %s1 = inlined_call_operand.hbm [shape: s32[3], index: 1, kind: output, shape index: {}]
  %s2 = sld [smem:[#allocation0]]
  $region44: #{hub_selector_forward.1} parent=0
    _
  %s4 = ssub.s32 1, %s2
  %s5 = scalar_select 0, %s4, %s2
  $region1: #{hub_selector_forward.1} parent=0
    #allocation5 [shape = 'u8[512]{0}', space=smem, size = 0x200, scoped, tag = 'output window, operand 0, single buffered']
    #allocation6 [shape = 's32[1]{0}', space=sflag, size = 0x4, scoped, tag = 'scoped memory for hub_selector_forward.1']
    %6 = vsyncpa [#allocation6], 0
    %p8 = scmp.lt.u32.totalorder 8, 8
    %p9 = pneg %p8
    // Predicated region
    $region2: #{hub_selector_forward.1} parent=1 // pred_check
      _
    $region3: #{hub_selector_forward.1} parent=1 // pred_check_branch
      %11 = sbr.rel (%p8) target = $region5
    $region4: #{hub_selector_forward.1} parent=1 // pred_region
      %s27 = sand.u32 8, 7
      %p28 = scmp.eq.s32.totalorder %s27, 0
      // Predicated region
      $region17: #{hub_selector_forward.1} parent=4 // pred_check
        %p29 = pneg %p28
      $region18: #{hub_selector_forward.1} parent=4 // pred_check_branch
        %31 = sbr.rel (%p29) target = $region20
      $region19: #{hub_selector_forward.1} parent=4 // pred_region
        loop: start=0, step=1, limit=1
        $region21: #{hub_selector_forward.1} parent=19 // loop_pre_header
          _
        $region22: #{hub_selector_forward.1} parent=19 // loop_header
          %s33 = sphi 0, %s37
          %p34 = scmp.ge.s32.totalorder %s33, 1
          %s38 = sphi %s0, %s0
          %s39 = sphi [#allocation2], [#allocation2]
        $region23: #{hub_selector_forward.1} parent=19 // loop_header_branch
          %36 = sbr.rel (%p34) target = $region27
        $region24: #{hub_selector_forward.1} parent=19 // loop_body
          %v40 = vld [vmem:[%s38] sm:$0xff]
          %41 = vst [vmem:[%s39] sm:$0xff] %v40
        $region25: #{hub_selector_forward.1} parent=19 // loop_footer
          %s37 = sadd.s32 1, %s33
        $region26: #{hub_selector_forward.1} parent=19 // loop_footer_branch
          %32 = sbr.rel target = $region22
        $region27: #{hub_selector_forward.1} parent=19 // loop_exit
          _
      $region20: #{hub_selector_forward.1} parent=4 // pred_fallthru
        _
      %p42 = pneg %p28
      // Predicated region
      $region28: #{hub_selector_forward.1} parent=4 // pred_check
        _
      $region29: #{hub_selector_forward.1} parent=4 // pred_check_branch
        %44 = sbr.rel (%p28) target = $region31
      $region30: #{hub_selector_forward.1} parent=4 // pred_region
        %s45 = sand.u32 8, 7
      $region31: #{hub_selector_forward.1} parent=4 // pred_fallthru
        _
    $region5: #{hub_selector_forward.1} parent=1 // pred_fallthru
      _
    // Predicated region
    $region6: #{hub_selector_forward.1} parent=1 // pred_check
      %p12 = pneg %p8
    $region7: #{hub_selector_forward.1} parent=1 // pred_check_branch
      %14 = sbr.rel (%p12) target = $region9
    $region8: #{hub_selector_forward.1} parent=1 // pred_region
      %s15 = sshll.u32 1, 8
      %s16 = ssub.s32 %s15, 1
      loop: start=0, step=1, limit=1
      $region10: #{hub_selector_forward.1} parent=8 // loop_pre_header
        _
      $region11: #{hub_selector_forward.1} parent=8 // loop_header
        %s18 = sphi 0, %s22
        %p19 = scmp.ge.s32.totalorder %s18, 1
        %s23 = sphi %s0, %s0
        %s24 = sphi [#allocation2], [#allocation2]
      $region12: #{hub_selector_forward.1} parent=8 // loop_header_branch
        %21 = sbr.rel (%p19) target = $region16
      $region13: #{hub_selector_forward.1} parent=8 // loop_body
        %v25 = vld [vmem:[%s23] sm:%s16]
        %26 = vst [vmem:[%s24] sm:%s16] %v25
      $region14: #{hub_selector_forward.1} parent=8 // loop_footer
        %s22 = sadd.s32 1, %s18
      $region15: #{hub_selector_forward.1} parent=8 // loop_footer_branch
        %17 = sbr.rel target = $region11
      $region16: #{hub_selector_forward.1} parent=8 // loop_exit
        _
    $region9: #{hub_selector_forward.1} parent=1 // pred_fallthru
      _
    // Predicated region
    $region32: #{hub_selector_forward.1} parent=1 // pred_check
      _
    $region33: #{hub_selector_forward.1} parent=1 // pred_check_branch
      %48 = sbr.rel (0) target = $region35
    $region34: #{hub_selector_forward.1} parent=1 // pred_region
      %49 = vsyncadd [#allocation4], 128
    $region35: #{hub_selector_forward.1} parent=1 // pred_fallthru
      _
    %s50 = smul.u32 8, 1
    %s51 = sshll.u32 %s50, 4
    %52 = dma.done [#allocation4], %s51
    %v53 = vld [vmem:[#allocation2] sm:$0xff]
    %v54 = vrot.slane %v53, 4
    %vm55 = vcmp.gt.s32.totalorder %v53, %v54
    %v56 = vsel %vm55, %v53, %v54
    %v57 = vrot.slane %v56, 2
    %vm58 = vcmp.gt.s32.totalorder %v56, %v57
    %v59 = vsel %vm58, %v56, %v57
    %v60 = vrot.slane %v59, 1
    %vm61 = vcmp.gt.s32.totalorder %v59, %v60
    %v62 = vsel %vm61, %v59, %v60
    %63 = vst [vmem:[#allocation3] sm:$0x1] %v62
    %v64 = vlaneseq
    %v65 = vshrl.u32 %v64, 7
    %v66 = vlaneseq
    %v67 = vand.u32 %v66, 127
    %v68 = vld [vmem:[#allocation3] sm:$0x1]
    %vm69 = vcmask 1040384
    %v70 = vsel %vm69, %v68, 2147483648
    %v71 = vand.u32 %v70, 65535
    %v72 = vshra.s32 %v70, 16
    %v73 = vcvt.s32.f32 %v71
    %v74 = vcvt.s32.f32 %v72
    %75 = vmax.xlane.f32.xlu0 %v74
    %v76 = vpop.xlane.xlu0 %75
    %vm77 = vcmp.eq.f32.partialorder %v74, %v76
    %v78 = vsel %vm77, %v73, -inf
    %79 = vmax.xlane.f32.xlu0 %v78
    %v80 = vpop.xlane.xlu0 %79
    %v81 = vcvt.f32.s32 %v80
    %v82 = vcvt.f32.s32 %v76
    %v83 = vshll.u32 %v82, 16
    %v84 = vadd.s32 %v83, %v81
    %v85 = vrot.slane %v84, 4
    %vm86 = vcmp.gt.s32.totalorder %v84, %v85
    %v87 = vsel %vm86, %v84, %v85
    %v88 = vrot.slane %v87, 2
    %vm89 = vcmp.gt.s32.totalorder %v87, %v88
    %v90 = vsel %vm89, %v87, %v88
    %v91 = vrot.slane %v90, 1
    %vm92 = vcmp.gt.s32.totalorder %v90, %v91
    %v93 = vsel %vm92, %v90, %v91
    %s94 = vtos %v93
    %v95 = vstv %s94
    %vm96 = vcmp.eq.s32.totalorder %v68, %v95
    %v97 = vsel %vm96, %v65, 1
    %v98 = vsel %vm69, %v97, 2147483647
    %v99 = vand.u32 %v98, 65535
    %v100 = vshra.s32 %v98, 16
    %v101 = vcvt.s32.f32 %v99
    %v102 = vcvt.s32.f32 %v100
    %103 = vmin.xlane.f32.xlu0 %v102
    %v104 = vpop.xlane.xlu0 %103
    %vm105 = vcmp.eq.f32.partialorder %v102, %v104
    %v106 = vsel %vm105, %v101, inf
    %107 = vmin.xlane.f32.xlu0 %v106
    %v108 = vpop.xlane.xlu0 %107
    %v109 = vcvt.f32.s32 %v108
    %v110 = vcvt.f32.s32 %v104
    %v111 = vshll.u32 %v110, 16
    %v112 = vadd.s32 %v111, %v109
    %v113 = vrot.slane %v112, 4
    %vm114 = vcmp.lt.s32.totalorder %v112, %v113
    %v115 = vsel %vm114, %v112, %v113
    %v116 = vrot.slane %v115, 2
    %vm117 = vcmp.lt.s32.totalorder %v115, %v116
    %v118 = vsel %vm117, %v115, %v116
    %v119 = vrot.slane %v118, 1
    %vm120 = vcmp.lt.s32.totalorder %v118, %v119
    %v121 = vsel %vm120, %v118, %v119
    %s122 = vtos %v121
    %s123 = smul.u32 %s122, 8
    %s124 = scalar_lea.vmem [#allocation2], %s123
    %v125 = vld [vmem:[%s124] sm:$0xff]
    %vm126 = vcmp.eq.s32.totalorder %v125, %v95
    %v127 = vsel %vm126, %v65, 8
    %v128 = vand.u32 %v127, 65535
    %v129 = vshra.s32 %v127, 16
    %v130 = vcvt.s32.f32 %v128
    %v131 = vcvt.s32.f32 %v129
    %132 = vmin.xlane.f32.xlu0 %v131
    %v133 = vpop.xlane.xlu0 %132
    %vm134 = vcmp.eq.f32.partialorder %v131, %v133
    %v135 = vsel %vm134, %v130, inf
    %136 = vmin.xlane.f32.xlu0 %v135
    %v137 = vpop.xlane.xlu0 %136
    %v138 = vcvt.f32.s32 %v137
    %v139 = vcvt.f32.s32 %v133
    %v140 = vshll.u32 %v139, 16
    %v141 = vadd.s32 %v140, %v138
    %v142 = vrot.slane %v141, 4
    %vm143 = vcmp.lt.s32.totalorder %v141, %v142
    %v144 = vsel %vm143, %v141, %v142
    %v145 = vrot.slane %v144, 2
    %vm146 = vcmp.lt.s32.totalorder %v144, %v145
    %v147 = vsel %vm146, %v144, %v145
    %v148 = vrot.slane %v147, 1
    %vm149 = vcmp.lt.s32.totalorder %v147, %v148
    %v150 = vsel %vm149, %v147, %v148
    %s151 = vtos %v150
    %v152 = vstv %s151
    %vm153 = vcmp.eq.s32.totalorder %v65, %v152
    %v154 = vsel %vm153, 1, 0
    %vm155 = vcmp.eq.s32.totalorder %v154, 1
    %vm156 = vmand %vm126, %vm155
    %v157 = vsel %vm156, %v67, 128
    %v158 = vand.u32 %v157, 65535
    %v159 = vshra.s32 %v157, 16
    %v160 = vcvt.s32.f32 %v158
    %v161 = vcvt.s32.f32 %v159
    %162 = vmin.xlane.f32.xlu0 %v161
    %v163 = vpop.xlane.xlu0 %162
    %vm164 = vcmp.eq.f32.partialorder %v161, %v163
    %v165 = vsel %vm164, %v160, inf
    %166 = vmin.xlane.f32.xlu0 %v165
    %v167 = vpop.xlane.xlu0 %166
    %v168 = vcvt.f32.s32 %v167
    %v169 = vcvt.f32.s32 %v163
    %v170 = vshll.u32 %v169, 16
    %v171 = vadd.s32 %v170, %v168
    %v172 = vrot.slane %v171, 4
    %vm173 = vcmp.lt.s32.totalorder %v171, %v172
    %v174 = vsel %vm173, %v171, %v172
    %v175 = vrot.slane %v174, 2
    %vm176 = vcmp.lt.s32.totalorder %v174, %v175
    %v177 = vsel %vm176, %v174, %v175
    %v178 = vrot.slane %v177, 1
    %vm179 = vcmp.lt.s32.totalorder %v177, %v178
    %v180 = vsel %vm179, %v177, %v178
    %s181 = vtos %v180
    %s182 = sadd.s32 %s123, %s151
    %s183 = smul.u32 %s182, 128
    %s184 = sadd.s32 %s183, %s181
    %s185 = scalar_lea.smem [#allocation5], 0
    %186 = sst [smem:[%s185]] %s184
    %v187 = vstv %s181
    %vm188 = vcmp.eq.s32.totalorder %v67, %v187
    %v189 = vsel %vm188, 1, 0
    %vm190 = vcmp.eq.s32.totalorder %v189, 1
    %vm191 = vmand %vm155, %vm190
    %v192 = vsel %vm191, 2147483648, %v125
    %193 = vst [vmem:[%s124] sm:$0xff] %v192
    %v194 = vsel %vm190, %v192, 2147483648
    %v195 = vand.u32 %v194, 65535
    %v196 = vshra.s32 %v194, 16
    %v197 = vcvt.s32.f32 %v195
    %v198 = vcvt.s32.f32 %v196
    %199 = vmax.xlane.f32.xlu0 %v198
    %v200 = vpop.xlane.xlu0 %199
    %vm201 = vcmp.eq.f32.partialorder %v198, %v200
    %v202 = vsel %vm201, %v197, -inf
    %203 = vmax.xlane.f32.xlu0 %v202
    %v204 = vpop.xlane.xlu0 %203
    %v205 = vcvt.f32.s32 %v204
    %v206 = vcvt.f32.s32 %v200
    %v207 = vshll.u32 %v206, 16
    %v208 = vadd.s32 %v207, %v205
    %v209 = vrot.slane %v208, 4
    %vm210 = vcmp.gt.s32.totalorder %v208, %v209
    %v211 = vsel %vm210, %v208, %v209
    %v212 = vrot.slane %v211, 2
    %vm213 = vcmp.gt.s32.totalorder %v211, %v212
    %v214 = vsel %vm213, %v211, %v212
    %v215 = vrot.slane %v214, 1
    %vm216 = vcmp.gt.s32.totalorder %v214, %v215
    %v217 = vsel %vm216, %v214, %v215
    %s218 = vtos %v217
    %v219 = vstv %s122
    %vm220 = vcmp.eq.s32.totalorder %v65, %v219
    %v221 = vsel %vm220, 1, 0
    %vm222 = vcmp.eq.s32.totalorder %v221, 1
    %vm223 = vmand %vm222, %vm188
    %v224 = vstv %s218
    %v225 = vsel %vm223, %v224, %v68
    %v226 = vsel %vm69, %v225, 2147483648
    %v227 = vand.u32 %v226, 65535
    %v228 = vshra.s32 %v226, 16
    %v229 = vcvt.s32.f32 %v227
    %v230 = vcvt.s32.f32 %v228
    %231 = vmax.xlane.f32.xlu0 %v230
    %v232 = vpop.xlane.xlu0 %231
    %vm233 = vcmp.eq.f32.partialorder %v230, %v232
    %v234 = vsel %vm233, %v229, -inf
    %235 = vmax.xlane.f32.xlu0 %v234
    %v236 = vpop.xlane.xlu0 %235
    %v237 = vcvt.f32.s32 %v236
    %v238 = vcvt.f32.s32 %v232
    %v239 = vshll.u32 %v238, 16
    %v240 = vadd.s32 %v239, %v237
    %v241 = vrot.slane %v240, 4
    %vm242 = vcmp.gt.s32.totalorder %v240, %v241
    %v243 = vsel %vm242, %v240, %v241
    %v244 = vrot.slane %v243, 2
    %vm245 = vcmp.gt.s32.totalorder %v243, %v244
    %v246 = vsel %vm245, %v243, %v244
    %v247 = vrot.slane %v246, 1
    %vm248 = vcmp.gt.s32.totalorder %v246, %v247
    %v249 = vsel %vm248, %v246, %v247
    %s250 = vtos %v249
    %v251 = vstv %s250
    %vm252 = vcmp.eq.s32.totalorder %v225, %v251
    %v253 = vsel %vm252, %v65, 1
    %v254 = vsel %vm69, %v253, 2147483647
    %v255 = vand.u32 %v254, 65535
    %v256 = vshra.s32 %v254, 16
    %v257 = vcvt.s32.f32 %v255
    %v258 = vcvt.s32.f32 %v256
    %259 = vmin.xlane.f32.xlu0 %v258
    %v260 = vpop.xlane.xlu0 %259
    %vm261 = vcmp.eq.f32.partialorder %v258, %v260
    %v262 = vsel %vm261, %v257, inf
    %263 = vmin.xlane.f32.xlu0 %v262
    %v264 = vpop.xlane.xlu0 %263
    %v265 = vcvt.f32.s32 %v264
    %v266 = vcvt.f32.s32 %v260
    %v267 = vshll.u32 %v266, 16
    %v268 = vadd.s32 %v267, %v265
    %v269 = vrot.slane %v268, 4
    %vm270 = vcmp.lt.s32.totalorder %v268, %v269
    %v271 = vsel %vm270, %v268, %v269
    %v272 = vrot.slane %v271, 2
    %vm273 = vcmp.lt.s32.totalorder %v271, %v272
    %v274 = vsel %vm273, %v271, %v272
    %v275 = vrot.slane %v274, 1
    %vm276 = vcmp.lt.s32.totalorder %v274, %v275
    %v277 = vsel %vm276, %v274, %v275
    %s278 = vtos %v277
    %s279 = smul.u32 %s278, 8
    %s280 = scalar_lea.vmem [#allocation2], %s279
    %v281 = vld [vmem:[%s280] sm:$0xff]
    %vm282 = vcmp.eq.s32.totalorder %v281, %v251
    %v283 = vsel %vm282, %v65, 8
    %v284 = vand.u32 %v283, 65535
    %v285 = vshra.s32 %v283, 16
    %v286 = vcvt.s32.f32 %v284
    %v287 = vcvt.s32.f32 %v285
    %288 = vmin.xlane.f32.xlu0 %v287
    %v289 = vpop.xlane.xlu0 %288
    %vm290 = vcmp.eq.f32.partialorder %v287, %v289
    %v291 = vsel %vm290, %v286, inf
    %292 = vmin.xlane.f32.xlu0 %v291
    %v293 = vpop.xlane.xlu0 %292
    %v294 = vcvt.f32.s32 %v293
    %v295 = vcvt.f32.s32 %v289
    %v296 = vshll.u32 %v295, 16
    %v297 = vadd.s32 %v296, %v294
    %v298 = vrot.slane %v297, 4
    %vm299 = vcmp.lt.s32.totalorder %v297, %v298
    %v300 = vsel %vm299, %v297, %v298
    %v301 = vrot.slane %v300, 2
    %vm302 = vcmp.lt.s32.totalorder %v300, %v301
    %v303 = vsel %vm302, %v300, %v301
    %v304 = vrot.slane %v303, 1
    %vm305 = vcmp.lt.s32.totalorder %v303, %v304
    %v306 = vsel %vm305, %v303, %v304
    %s307 = vtos %v306
    %v308 = vstv %s307
    %vm309 = vcmp.eq.s32.totalorder %v65, %v308
    %v310 = vsel %vm309, 1, 0
    %vm311 = vcmp.eq.s32.totalorder %v310, 1
    %vm312 = vmand %vm282, %vm311
    %v313 = vsel %vm312, %v67, 128
    %v314 = vand.u32 %v313, 65535
    %v315 = vshra.s32 %v313, 16
    %v316 = vcvt.s32.f32 %v314
    %v317 = vcvt.s32.f32 %v315
    %318 = vmin.xlane.f32.xlu0 %v317
    %v319 = vpop.xlane.xlu0 %318
    %vm320 = vcmp.eq.f32.partialorder %v317, %v319
    %v321 = vsel %vm320, %v316, inf
    %322 = vmin.xlane.f32.xlu0 %v321
    %v323 = vpop.xlane.xlu0 %322
    %v324 = vcvt.f32.s32 %v323
    %v325 = vcvt.f32.s32 %v319
    %v326 = vshll.u32 %v325, 16
    %v327 = vadd.s32 %v326, %v324
    %v328 = vrot.slane %v327, 4
    %vm329 = vcmp.lt.s32.totalorder %v327, %v328
    %v330 = vsel %vm329, %v327, %v328
    %v331 = vrot.slane %v330, 2
    %vm332 = vcmp.lt.s32.totalorder %v330, %v331
    %v333 = vsel %vm332, %v330, %v331
    %v334 = vrot.slane %v333, 1
    %vm335 = vcmp.lt.s32.totalorder %v333, %v334
    %v336 = vsel %vm335, %v333, %v334
    %s337 = vtos %v336
    %s338 = sadd.s32 %s279, %s307
    %s339 = smul.u32 %s338, 128
    %s340 = sadd.s32 %s339, %s337
    %s341 = scalar_lea.smem [#allocation5], 1
    %342 = sst [smem:[%s341]] %s340
    %v343 = vstv %s337
    %vm344 = vcmp.eq.s32.totalorder %v67, %v343
    %v345 = vsel %vm344, 1, 0
    %vm346 = vcmp.eq.s32.totalorder %v345, 1
    %vm347 = vmand %vm311, %vm346
    %v348 = vsel %vm347, 2147483648, %v281
    %349 = vst [vmem:[%s280] sm:$0xff] %v348
    %v350 = vsel %vm346, %v348, 2147483648
    %v351 = vand.u32 %v350, 65535
    %v352 = vshra.s32 %v350, 16
    %v353 = vcvt.s32.f32 %v351
    %v354 = vcvt.s32.f32 %v352
    %355 = vmax.xlane.f32.xlu0 %v354
    %v356 = vpop.xlane.xlu0 %355
    %vm357 = vcmp.eq.f32.partialorder %v354, %v356
    %v358 = vsel %vm357, %v353, -inf
    %359 = vmax.xlane.f32.xlu0 %v358
    %v360 = vpop.xlane.xlu0 %359
    %v361 = vcvt.f32.s32 %v360
    %v362 = vcvt.f32.s32 %v356
    %v363 = vshll.u32 %v362, 16
    %v364 = vadd.s32 %v363, %v361
    %v365 = vrot.slane %v364, 4
    %vm366 = vcmp.gt.s32.totalorder %v364, %v365
    %v367 = vsel %vm366, %v364, %v365
    %v368 = vrot.slane %v367, 2
    %vm369 = vcmp.gt.s32.totalorder %v367, %v368
    %v370 = vsel %vm369, %v367, %v368
    %v371 = vrot.slane %v370, 1
    %vm372 = vcmp.gt.s32.totalorder %v370, %v371
    %v373 = vsel %vm372, %v370, %v371
    %s374 = vtos %v373
    %v375 = vstv %s278
    %vm376 = vcmp.eq.s32.totalorder %v65, %v375
    %v377 = vsel %vm376, 1, 0
    %vm378 = vcmp.eq.s32.totalorder %v377, 1
    %vm379 = vmand %vm378, %vm344
    %v380 = vstv %s374
    %v381 = vsel %vm379, %v380, %v225
    %v382 = vsel %vm69, %v381, 2147483648
    %v383 = vand.u32 %v382, 65535
    %v384 = vshra.s32 %v382, 16
    %v385 = vcvt.s32.f32 %v383
    %v386 = vcvt.s32.f32 %v384
    %387 = vmax.xlane.f32.xlu0 %v386
    %v388 = vpop.xlane.xlu0 %387
    %vm389 = vcmp.eq.f32.partialorder %v386, %v388
    %v390 = vsel %vm389, %v385, -inf
    %391 = vmax.xlane.f32.xlu0 %v390
    %v392 = vpop.xlane.xlu0 %391
    %v393 = vcvt.f32.s32 %v392
    %v394 = vcvt.f32.s32 %v388
    %v395 = vshll.u32 %v394, 16
    %v396 = vadd.s32 %v395, %v393
    %v397 = vrot.slane %v396, 4
    %vm398 = vcmp.gt.s32.totalorder %v396, %v397
    %v399 = vsel %vm398, %v396, %v397
    %v400 = vrot.slane %v399, 2
    %vm401 = vcmp.gt.s32.totalorder %v399, %v400
    %v402 = vsel %vm401, %v399, %v400
    %v403 = vrot.slane %v402, 1
    %vm404 = vcmp.gt.s32.totalorder %v402, %v403
    %v405 = vsel %vm404, %v402, %v403
    %s406 = vtos %v405
    %v407 = vstv %s406
    %vm408 = vcmp.eq.s32.totalorder %v381, %v407
    %v409 = vsel %vm408, %v65, 1
    %v410 = vsel %vm69, %v409, 2147483647
    %v411 = vand.u32 %v410, 65535
    %v412 = vshra.s32 %v410, 16
    %v413 = vcvt.s32.f32 %v411
    %v414 = vcvt.s32.f32 %v412
    %415 = vmin.xlane.f32.xlu0 %v414
    %v416 = vpop.xlane.xlu0 %415
    %vm417 = vcmp.eq.f32.partialorder %v414, %v416
    %v418 = vsel %vm417, %v413, inf
    %419 = vmin.xlane.f32.xlu0 %v418
    %v420 = vpop.xlane.xlu0 %419
    %v421 = vcvt.f32.s32 %v420
    %v422 = vcvt.f32.s32 %v416
    %v423 = vshll.u32 %v422, 16
    %v424 = vadd.s32 %v423, %v421
    %v425 = vrot.slane %v424, 4
    %vm426 = vcmp.lt.s32.totalorder %v424, %v425
    %v427 = vsel %vm426, %v424, %v425
    %v428 = vrot.slane %v427, 2
    %vm429 = vcmp.lt.s32.totalorder %v427, %v428
    %v430 = vsel %vm429, %v427, %v428
    %v431 = vrot.slane %v430, 1
    %vm432 = vcmp.lt.s32.totalorder %v430, %v431
    %v433 = vsel %vm432, %v430, %v431
    %s434 = vtos %v433
    %s435 = smul.u32 %s434, 8
    %s436 = scalar_lea.vmem [#allocation2], %s435
    %v437 = vld [vmem:[%s436] sm:$0xff]
    %vm438 = vcmp.eq.s32.totalorder %v437, %v407
    %v439 = vsel %vm438, %v65, 8
    %v440 = vand.u32 %v439, 65535
    %v441 = vshra.s32 %v439, 16
    %v442 = vcvt.s32.f32 %v440
    %v443 = vcvt.s32.f32 %v441
    %444 = vmin.xlane.f32.xlu0 %v443
    %v445 = vpop.xlane.xlu0 %444
    %vm446 = vcmp.eq.f32.partialorder %v443, %v445
    %v447 = vsel %vm446, %v442, inf
    %448 = vmin.xlane.f32.xlu0 %v447
    %v449 = vpop.xlane.xlu0 %448
    %v450 = vcvt.f32.s32 %v449
    %v451 = vcvt.f32.s32 %v445
    %v452 = vshll.u32 %v451, 16
    %v453 = vadd.s32 %v452, %v450
    %v454 = vrot.slane %v453, 4
    %vm455 = vcmp.lt.s32.totalorder %v453, %v454
    %v456 = vsel %vm455, %v453, %v454
    %v457 = vrot.slane %v456, 2
    %vm458 = vcmp.lt.s32.totalorder %v456, %v457
    %v459 = vsel %vm458, %v456, %v457
    %v460 = vrot.slane %v459, 1
    %vm461 = vcmp.lt.s32.totalorder %v459, %v460
    %v462 = vsel %vm461, %v459, %v460
    %s463 = vtos %v462
    %v464 = vstv %s463
    %vm465 = vcmp.eq.s32.totalorder %v65, %v464
    %v466 = vsel %vm465, 1, 0
    %vm467 = vcmp.eq.s32.totalorder %v466, 1
    %vm468 = vmand %vm438, %vm467
    %v469 = vsel %vm468, %v67, 128
    %v470 = vand.u32 %v469, 65535
    %v471 = vshra.s32 %v469, 16
    %v472 = vcvt.s32.f32 %v470
    %v473 = vcvt.s32.f32 %v471
    %474 = vmin.xlane.f32.xlu0 %v473
    %v475 = vpop.xlane.xlu0 %474
    %vm476 = vcmp.eq.f32.partialorder %v473, %v475
    %v477 = vsel %vm476, %v472, inf
    %478 = vmin.xlane.f32.xlu0 %v477
    %v479 = vpop.xlane.xlu0 %478
    %v480 = vcvt.f32.s32 %v479
    %v481 = vcvt.f32.s32 %v475
    %v482 = vshll.u32 %v481, 16
    %v483 = vadd.s32 %v482, %v480
    %v484 = vrot.slane %v483, 4
    %vm485 = vcmp.lt.s32.totalorder %v483, %v484
    %v486 = vsel %vm485, %v483, %v484
    %v487 = vrot.slane %v486, 2
    %vm488 = vcmp.lt.s32.totalorder %v486, %v487
    %v489 = vsel %vm488, %v486, %v487
    %v490 = vrot.slane %v489, 1
    %vm491 = vcmp.lt.s32.totalorder %v489, %v490
    %v492 = vsel %vm491, %v489, %v490
    %s493 = vtos %v492
    %s494 = sadd.s32 %s435, %s463
    %s495 = smul.u32 %s494, 128
    %s496 = sadd.s32 %s495, %s493
    %s497 = scalar_lea.smem [#allocation5], 2
    %498 = sst [smem:[%s497]] %s496
    %v499 = vstv %s493
    %vm500 = vcmp.eq.s32.totalorder %v67, %v499
    %v501 = vsel %vm500, 1, 0
    %vm502 = vcmp.eq.s32.totalorder %v501, 1
    %vm503 = vmand %vm467, %vm502
    %v504 = vsel %vm503, 2147483648, %v437
    %505 = vst [vmem:[%s436] sm:$0xff] %v504
    // Predicated region
    $region36: #{hub_selector_forward.1} parent=1 // pred_check
      _
    $region37: #{hub_selector_forward.1} parent=1 // pred_check_branch
      %507 = sbr.rel (0) target = $region39
    $region38: #{hub_selector_forward.1} parent=1 // pred_region
      %s509 = ssub.s32 16, 16
      %510 = vsyncadd [#allocation6], %s509
      %513 = dma.smem_to_hbm [#allocation5], 16, %s1, [#allocation6]
    $region39: #{hub_selector_forward.1} parent=1 // pred_fallthru
      _
    // Predicated region
    $region40: #{hub_selector_forward.1} parent=1 // pred_check
      _
    $region41: #{hub_selector_forward.1} parent=1 // pred_check_branch
      %515 = sbr.rel (0) target = $region43
    $region42: #{hub_selector_forward.1} parent=1 // pred_region
      %516 = dma.done [#allocation6], 16
    $region43: #{hub_selector_forward.1} parent=1 // pred_fallthru
      _
    %517 = sfence
    %518 = vsyncpa [#allocation6], 1
  %519 = vsyncmov [#allocation4]
  %s520 = vpop.sfrf %519
  %p521 = scmp.eq.s32.totalorder %s520, 0
  %p522 = pneg %p521
  %524 = shalt.err (%p522)

</llo_original>
